<compile_context>
chip_gen: v7x
topology: tpu7x:2x2x1
jax: 0.10.0
libtpu: 0.0.40
codegen_flags: <defaults>
</compile_context>

<pallas_src>
import functools
import math

import jax
import jax.numpy as jnp
from jax.experimental import pallas as pl
from jax.experimental.pallas import tpu as pltpu


def _residual_kernel(x_ref, w_ref, b_ref, o_ref, normed_ref, *, eps, n_col_tiles):
    """One (row-tile, col-tile) grid step.

    x_ref:      (tm, D)  input rows (full feature width; reused across column tiles)
    w_ref:      (D, tn)  gamma-folded weight column block (bf16)
    b_ref:      (1, tn)  beta-folded bias column block (f32)
    o_ref:      (tm, tn) output block
    normed_ref: (tm, D)  scratch: LayerNorm output, computed once per row tile (j == 0)
    """
    tn = o_ref.shape[-1]
    D = x_ref.shape[-1]
    j = pl.program_id(1)

    # --- LayerNorm once per row tile (unbiased std, eps added to std — module semantics).
    # gamma/beta are already folded into W / bias at parameter-prep time.
    @pl.when(j == 0)
    def _():
        x = x_ref[...].astype(jnp.float32)
        mean = jnp.mean(x, axis=-1, keepdims=True)                              # (tm, 1)
        centered = x - mean
        var_unbiased = jnp.sum(centered * centered, axis=-1, keepdims=True) * (1.0 / (D - 1))
        # (tm, 1) reciprocal -> EUP slot; approx error << the bf16 matmul error below.
        inv = pl.reciprocal(jnp.sqrt(var_unbiased) + eps, approx=True)
        normed_ref[...] = (centered * inv).astype(normed_ref.dtype)

    # --- sub_layer: Linear(d_model -> d_model) on the MXU, bf16 in / f32 accumulate.
    y = jnp.dot(normed_ref[...].astype(jnp.bfloat16), w_ref[...],
                preferred_element_type=jnp.float32)
    y = y + b_ref[...]

    # --- dropout: identity in eval mode.
    # TODO(synk): training-mode dropout would use pltpu.prng_seed / prng_random_bits.

    # --- residual add; slice the matching x columns when W is column-tiled.
    if n_col_tiles == 1:
        x_tile = x_ref[...]
    else:
        col = pl.multiple_of(j * tn, tn)
        x_tile = x_ref[:, pl.ds(col, tn)]
    o_ref[...] = (x_tile.astype(jnp.float32) + y).astype(o_ref.dtype)


def prepare_residual_params(gamma, beta, w, b, *, weight_dtype=jnp.bfloat16):
    """One-time, parameter-load-time prep (do NOT call per forward pass):
      w_eff = gamma[:, None] * W  (cast to bf16 for the MXU)
      b_eff = beta @ W + b        (f32, shape (1, D))
    so the kernel only computes (centered * inv) @ w_eff + b_eff."""
    gamma32 = gamma.astype(jnp.float32)
    beta32 = beta.astype(jnp.float32)
    w32 = w.astype(jnp.float32)
    w_eff = (gamma32[:, None] * w32).astype(weight_dtype)
    b_eff = (beta32 @ w32 + b.astype(jnp.float32)).reshape(1, -1)
    return w_eff, b_eff


def _round_up(a, m):
    return pl.cdiv(a, m) * m


def residual_connection(x, w_eff, b_eff, *, eps=1e-6, tm=None):
    """x: (..., D); w_eff: (D, D) bf16 (gamma folded); b_eff: (1, D) f32 (beta folded)."""
    *lead, D = x.shape
    rows = math.prod(lead) if lead else 1
    x2d = x.reshape(rows, D)

    out_dtype = x.dtype
    itemsize = jnp.dtype(out_dtype).itemsize
    sub = max(8, 32 // itemsize)         # sublane multiple: 8 f32 / 16 bf16 / 32 int8

    # Per-generation VMEM budget (v5e/v6e: 128 MiB physical, v7x: 64 MiB per TC).
    try:
        vmem_cap = pltpu.get_tpu_info().vmem_capacity_bytes
    except Exception:
        vmem_cap = 64 << 20
    vmem_limit = min(int(vmem_cap) * 85 // 100, 112 << 20)

    # Column-tile W when a resident (D, D) bf16 block would blow the budget (v7x, D >= ~4K).
    w_budget = min(16 << 20, vmem_limit // 3)
    if D % 128 == 0 and 2 * D * D > w_budget:
        tn = min(D, max(128, (w_budget // (2 * D)) // 128 * 128))
    else:
        tn = D
    n_col = pl.cdiv(D, tn)

    # Row tile: large (amortise per-step overhead, feed the MXU), dtype-aligned, and with
    # >= 2 row steps so the "parallel" row axis can shard across v7x's 2 TensorCores.
    if tm is None:
        tm = 512 if D <= 2048 else 256
    tm = min(tm, _round_up(rows, sub))
    tm = _round_up(tm, sub)
    if pl.cdiv(rows, tm) < 2 and rows > sub:
        tm = _round_up(pl.cdiv(rows, 2), sub)

    normed_dtype = jnp.bfloat16 if tm % 16 == 0 else jnp.float32

    def vmem_estimate(tm_):
        w_bufs = 1 if n_col == 1 else 2
        return (2 * tm_ * D * itemsize                                # x, double-buffered
                + 2 * tm_ * tn * itemsize                             # out, double-buffered
                + w_bufs * D * tn * 2                                 # W (bf16)
                + w_bufs * tn * 4                                     # bias
                + tm_ * D * jnp.dtype(normed_dtype).itemsize)         # LN scratch

    while tm > sub and vmem_estimate(tm) > vmem_limit:
        tm = max(sub, _round_up(tm // 2, sub))

    # Constant-index operands: single-buffer (second buffer would be pure VMEM waste).
    const_mode = pl.Buffered(1) if n_col == 1 else None

    # Ragged last row tile is fine: every op is row-local and OOB output rows are dropped,
    # so no host-side pad / slice (and no extra HBM pass) is needed.
    grid = (pl.cdiv(rows, tm), n_col)

    kernel = functools.partial(_residual_kernel, eps=eps, n_col_tiles=n_col)

    out2d = pl.pallas_call(
        kernel,
        out_shape=jax.ShapeDtypeStruct((rows, D), out_dtype),
        grid_spec=pltpu.PrefetchScalarGridSpec(
            num_scalar_prefetch=0,
            grid=grid,
            in_specs=[
                pl.BlockSpec((tm, D), lambda i, j: (i, 0)),                             # x rows
                pl.BlockSpec((D, tn), lambda i, j: (0, j), pipeline_mode=const_mode),   # W
                pl.BlockSpec((1, tn), lambda i, j: (0, j), pipeline_mode=const_mode),   # bias
            ],
            out_specs=pl.BlockSpec((tm, tn), lambda i, j: (i, j)),
            scratch_shapes=[pltpu.VMEM((tm, D), normed_dtype)],
        ),
        compiler_params=pltpu.CompilerParams(
            dimension_semantics=("parallel", "arbitrary"),
            vmem_limit_bytes=vmem_limit,
        ),
    )(x2d, w_eff, b_eff)

    return out2d.reshape(*lead, D)


if __name__ == "__main__":
    B, S, D = 2, 8, 128  # batch, seq, d_model

    key = jax.random.PRNGKey(0)
    kx, kw, kb, kg, kbe = jax.random.split(key, 5)

    x = jax.random.normal(kx, (B, S, D), dtype=jnp.float32)

    # Non-trivial gamma/beta to exercise the parameter fold (module init is ones/zeros).
    gamma = (1.0 + 0.1 * jax.random.normal(kg, (D,), dtype=jnp.float32))
    beta = 0.05 * jax.random.normal(kbe, (D,), dtype=jnp.float32)

    # sub_layer = Linear(d_model, d_model), deterministic init.
    w = jax.random.normal(kw, (D, D), dtype=jnp.float32) / jnp.sqrt(D)
    b = jax.random.normal(kb, (D,), dtype=jnp.float32) * 0.01

    # One-time parameter prep (fold gamma/beta, cast W to bf16) — parameter-load time,
    # not per call.
    w_eff, b_eff = prepare_residual_params(gamma, beta, w, b)

    out = residual_connection(x, w_eff, b_eff)
    jax.block_until_ready(out)

    # Pure-JAX f32 reference matching the PyTorch module semantics.
    x32 = x.astype(jnp.float32)
    mean = jnp.mean(x32, axis=-1, keepdims=True)
    std = jnp.sqrt(jnp.sum((x32 - mean) ** 2, axis=-1, keepdims=True) / (D - 1))
    normed = (x32 - mean) * gamma / (std + 1e-6) + beta
    ref = x32 + (normed @ w + b)

    # Tolerance accounts for the bf16 MXU path + approx EUP reciprocal.
    assert jnp.allclose(out, ref, atol=5e-2, rtol=5e-2), "mismatch vs reference"

    print("KERNEL_OK")
</pallas_src>

<mosaic_0001>
module attributes {stable_mosaic.version = 11 : i64} {
  func.func @_residual_kernel(%arg0: i32, %arg1: i32, %arg2: memref<8x128xf32, #tpu.memory_space<vmem>>, %arg3: memref<128x128xbf16, #tpu.memory_space<vmem>>, %arg4: memref<1x128xf32, #tpu.memory_space<vmem>>, %arg5: memref<8x128xf32, #tpu.memory_space<vmem>>, %arg6: memref<8x128xf32, #tpu.memory_space<vmem>>) attributes {dimension_semantics = [#tpu.dimension_semantics<parallel>, #tpu.dimension_semantics<arbitrary>], iteration_bounds = array<i64: 2, 1>, scalar_prefetch = 0 : i64, scratch_operands = 1 : i64, tpu.core_type = #tpu.core_type<tc>, window_params = [{transform_indices = @transform_0, window_bounds = array<i64: 8, 128>}, {pipeline_mode = #tpu.pipeline_mode<synchronous>, transform_indices = @transform_1, window_bounds = array<i64: 128, 128>}, {pipeline_mode = #tpu.pipeline_mode<synchronous>, transform_indices = @transform_2, window_bounds = array<i64: 1, 128>}, {transform_indices = @transform_3, window_bounds = array<i64: 8, 128>}]} {
    %c0_i32 = arith.constant 0 : i32
    %0 = arith.cmpi eq, %arg1, %c0_i32 : i32
    %1 = arith.extui %0 : i1 to i32
    %c0_i32_0 = arith.constant 0 : i32
    %2 = arith.cmpi ne, %1, %c0_i32_0 : i32
    scf.if %2 {
      %c0_10 = arith.constant 0 : index
      %c0_11 = arith.constant 0 : index
      %13 = vector.load %arg2[%c0_10, %c0_11] : memref<8x128xf32, #tpu.memory_space<vmem>>, vector<8x128xf32>
      %cst_12 = arith.constant dense<0.000000e+00> : vector<8xf32>
      %14 = vector.multi_reduction <add>, %13, %cst_12 [1] : vector<8x128xf32> to vector<8xf32>
      %15 = vector.shape_cast %14 : vector<8xf32> to vector<8x1xf32>
      %cst_13 = arith.constant 1.280000e+02 : f32
      %16 = vector.broadcast %cst_13 : f32 to vector<8x1xf32>
      %17 = arith.divf %15, %16 : vector<8x1xf32>
      %18 = vector.broadcast %17 : vector<8x1xf32> to vector<8x128xf32>
      %19 = arith.subf %13, %18 : vector<8x128xf32>
      %20 = arith.mulf %19, %19 : vector<8x128xf32>
      %cst_14 = arith.constant dense<0.000000e+00> : vector<8xf32>
      %21 = vector.multi_reduction <add>, %20, %cst_14 [1] : vector<8x128xf32> to vector<8xf32>
      %22 = vector.shape_cast %21 : vector<8xf32> to vector<8x1xf32>
      %cst_15 = arith.constant 0.00787401571 : f32
      %23 = vector.broadcast %cst_15 : f32 to vector<8x1xf32>
      %24 = arith.mulf %22, %23 : vector<8x1xf32>
      %25 = math.sqrt %24 : vector<8x1xf32>
      %cst_16 = arith.constant 9.99999997E-7 : f32
      %26 = vector.broadcast %cst_16 : f32 to vector<8x1xf32>
      %27 = arith.addf %25, %26 : vector<8x1xf32>
      %28 = tpu.reciprocal %27 {approx = true} : vector<8x1xf32> -> vector<8x1xf32>
      %29 = vector.broadcast %28 : vector<8x1xf32> to vector<8x128xf32>
      %30 = arith.mulf %19, %29 : vector<8x128xf32>
      %c0_17 = arith.constant 0 : index
      %c0_18 = arith.constant 0 : index
      %31 = vector.load %arg6[%c0_17, %c0_18] : memref<8x128xf32, #tpu.memory_space<vmem>>, vector<8x128xf32>
      tpu.vector_store %arg6[%c0_17, %c0_18], %30 {strides = array<i32>} : memref<8x128xf32, #tpu.memory_space<vmem>>, vector<8x128xf32>,
    } else {
    }
    %c0 = arith.constant 0 : index
    %c0_1 = arith.constant 0 : index
    %3 = vector.load %arg6[%c0, %c0_1] : memref<8x128xf32, #tpu.memory_space<vmem>>, vector<8x128xf32>
    %4 = arith.truncf %3 : vector<8x128xf32> to vector<8x128xbf16>
    %c0_2 = arith.constant 0 : index
    %c0_3 = arith.constant 0 : index
    %5 = vector.load %arg3[%c0_2, %c0_3] : memref<128x128xbf16, #tpu.memory_space<vmem>>, vector<128x128xbf16>
    %cst = arith.constant dense<0.000000e+00> : vector<8x128xf32>
    %6 = tpu.matmul %4, %5, %cst {dimension_numbers = #tpu.dot_dimension_numbers<[1], [0], [0], [1], [0, 0, 1, 1], [], []>} : vector<8x128xbf16>, vector<128x128xbf16>, vector<8x128xf32> -> vector<8x128xf32>
    %c0_4 = arith.constant 0 : index
    %c0_5 = arith.constant 0 : index
    %7 = vector.load %arg4[%c0_4, %c0_5] : memref<1x128xf32, #tpu.memory_space<vmem>>, vector<1x128xf32>
    %8 = vector.broadcast %7 : vector<1x128xf32> to vector<8x128xf32>
    %9 = arith.addf %6, %8 : vector<8x128xf32>
    %c0_6 = arith.constant 0 : index
    %c0_7 = arith.constant 0 : index
    %10 = vector.load %arg2[%c0_6, %c0_7] : memref<8x128xf32, #tpu.memory_space<vmem>>, vector<8x128xf32>
    %11 = arith.addf %10, %9 : vector<8x128xf32>
    %c0_8 = arith.constant 0 : index
    %c0_9 = arith.constant 0 : index
    %12 = vector.load %arg5[%c0_8, %c0_9] : memref<8x128xf32, #tpu.memory_space<vmem>>, vector<8x128xf32>
    tpu.vector_store %arg5[%c0_8, %c0_9], %11 {strides = array<i32>} : memref<8x128xf32, #tpu.memory_space<vmem>>, vector<8x128xf32>,
    return
  }
  func.func @transform_0(%arg0: i32, %arg1: i32) -> (i32, i32) {
    %c0_i32 = arith.constant 0 : i32
    %c0_i32_0 = arith.constant 0 : i32
    return %arg0, %c0_i32 : i32, i32
  }
  func.func @transform_1(%arg0: i32, %arg1: i32) -> (i32, i32) {
    %c0_i32 = arith.constant 0 : i32
    %c0_i32_0 = arith.constant 0 : i32
    return %c0_i32, %arg1 : i32, i32
  }
  func.func @transform_2(%arg0: i32, %arg1: i32) -> (i32, i32) {
    %c0_i32 = arith.constant 0 : i32
    %c0_i32_0 = arith.constant 0 : i32
    return %c0_i32, %arg1 : i32, i32
  }
  func.func @transform_3(%arg0: i32, %arg1: i32) -> (i32, i32) {
    %c0_i32 = arith.constant 0 : i32
    return %arg0, %arg1 : i32, i32
  }
}

</mosaic_0001>

<llo_original>
// kernel: tpu_custom_call.1
$region0: #{tpu_custom_call.1}
  #allocation0 [shape = 'u32[]', space=smem, size = 0x4, offset = 0x4, fixed_abs, tag = 'smem constant byte address 0x4 - core index']
  #allocation1 [shape = 'u32[144,128]{1,0:T(1,128)}', space=vmem, size = 0x12000, scoped, tag = 'internal scratch']
  #allocation2 [shape = 'f32[8,128]{1,0:T(8,128)}', space=vmem, size = 0x1000, scoped, tag = 'scratch operand']
  %s0 = inlined_call_operand.hbm [shape: f32[16,128], index: 0, kind: input, shape index: {}]
  %s1 = inlined_call_operand.hbm [shape: bf16[128,128], index: 1, kind: input, shape index: {}]
  %s2 = inlined_call_operand.vmem [shape: f32[1,128], index: 2, kind: input, shape index: {}]
  %s3 = inlined_call_operand.hbm [shape: f32[16,128], index: 3, kind: output, shape index: {}]
  %s4 = sld [smem:[#allocation0]]
  $region57: #{tpu_custom_call.1} parent=0
    _
  %s6 = ssub.s32 1, %s4
  %s7 = scalar_select 0, %s6, %s4
  $region1: #{tpu_custom_call.1} parent=0
    #allocation3 [shape = 'u8[8192]{0}', space=vmem, size = 0x2000, scoped, tag = 'input window, operand 0']
    #allocation4 [shape = 's32[2]{0}', space=sflag, size = 0x8, scoped, tag = 'scoped memory for tpu_custom_call.1']
    #allocation5 [shape = 's32[2]{0}', space=sflag, size = 0x8, scoped, tag = 'scoped memory for tpu_custom_call.1']
    #allocation6 [shape = 'u8[32768]{0}', space=vmem, size = 0x8000, scoped, tag = 'input window, operand 1, single buffered']
    #allocation7 [shape = 's32[1]{0}', space=sflag, size = 0x4, scoped, tag = 'scoped memory for tpu_custom_call.1']
    #allocation8 [shape = 'u8[8192]{0}', space=vmem, size = 0x2000, scoped, tag = 'output window, operand 0']
    %8 = vsyncpa [#allocation4], 0
    %s9 = scalar_lea.sflag [#allocation4], 1
    %10 = vsyncpa %s9, 0
    %11 = vsyncpa [#allocation7], 0
    %12 = vsyncpa [#allocation5], 0
    %s13 = scalar_lea.sflag [#allocation5], 1
    %14 = vsyncpa %s13, 0
    loop: start=0, step=1, limit=4
    $region2: #{tpu_custom_call.1} parent=1 // loop_pre_header
      _
    $region3: #{tpu_custom_call.1} parent=1 // loop_header
      %s16 = sphi 0, %s20
      %p17 = scmp.ge.s32.totalorder %s16, 4
      %s23 = sphi 0, %s35
      %s24 = sphi 0, %s31
      %s25 = sphi 0, %s23
      %s26 = sphi 0, %s24
      %s27 = sphi 0, %s25
      %s28 = sphi 0, %s26
      %s38 = sphi 0, %s40
      %s41 = sphi 0, %s38
      %s42 = sphi 0, %s41
      %s58 = sphi 0, %s42
      %s64 = sphi 0, %s66
      %s67 = sphi 0, %s64
      %s68 = sphi 0, %s67
      %s84 = sphi 0, %s68
      %s90 = sphi 0, %s92
      %s93 = sphi 0, %s90
      %s94 = sphi 0, %s93
      %s110 = sphi 0, %s94
      %s118 = sphi 0, %s120
      %s121 = sphi 0, %s118
      %s122 = sphi 0, %s121
      %s138 = sphi 0, %s122
    $region4: #{tpu_custom_call.1} parent=1 // loop_header_branch
      %19 = sbr.rel (%p17) target = $region8
    $region5: #{tpu_custom_call.1} parent=1 // loop_body
      %s21 = ssub.s32 %s16, 1
      %s22 = ssub.s32 %s16, 2
      %s29 = sadd.s32 1, %s24
      %p30 = scmp.ge.s32.totalorder %s29, 1
      %s31 = scalar_select %p30, 0, %s29
      %s32 = sadd.s32 1, %s23
      %s33 = scalar_select %p30, %s32, %s23
      %p34 = scmp.ge.s32.totalorder %s33, 2
      %s35 = scalar_select %p34, 0, %s33
      %s36 = ssub.s32 %s23, %s35
      %p37 = scmp.eq.s32.totalorder %s36, 0
      %s39 = sadd.s32 %s38, 1
      %s40 = scalar_select %p37, %s38, %s39
      %p43 = pneg %p37
      %p44 = scmp.eq.s32.totalorder %s16, 1
      %p45 = por %p43, %p44
      %p46 = scmp.ne.s32.totalorder %s38, %s41
      %p47 = scmp.eq.s32.totalorder %s16, 0
      %p48 = por %p46, %p47
      %p49 = scmp.ne.s32.totalorder %s38, %s41
      %p50 = scmp.eq.s32.totalorder %s21, 1
      %p51 = por %p49, %p50
      %p52 = scmp.ne.s32.totalorder %s41, %s42
      %p53 = scmp.eq.s32.totalorder %s21, 0
      %p54 = por %p52, %p53
      %p55 = scmp.ne.s32.totalorder %s41, %s42
      %p56 = scmp.eq.s32.totalorder %s22, 1
      %p57 = por %p55, %p56
      %p59 = scmp.ne.s32.totalorder %s42, %s58
      %p60 = scmp.eq.s32.totalorder %s22, 0
      %p61 = por %p59, %p60
      %s62 = ssub.s32 %s24, %s31
      %p63 = scmp.eq.s32.totalorder %s62, 0
      %s65 = sadd.s32 %s64, 1
      %s66 = scalar_select %p63, %s64, %s65
      %p69 = pneg %p63
      %p70 = scmp.eq.s32.totalorder %s16, 1
      %p71 = por %p69, %p70
      %p72 = scmp.ne.s32.totalorder %s64, %s67
      %p73 = scmp.eq.s32.totalorder %s16, 0
      %p74 = por %p72, %p73
      %p75 = scmp.ne.s32.totalorder %s64, %s67
      %p76 = scmp.eq.s32.totalorder %s21, 1
      %p77 = por %p75, %p76
      %p78 = scmp.ne.s32.totalorder %s67, %s68
      %p79 = scmp.eq.s32.totalorder %s21, 0
      %p80 = por %p78, %p79
      %p81 = scmp.ne.s32.totalorder %s67, %s68
      %p82 = scmp.eq.s32.totalorder %s22, 1
      %p83 = por %p81, %p82
      %p85 = scmp.ne.s32.totalorder %s68, %s84
      %p86 = scmp.eq.s32.totalorder %s22, 0
      %p87 = por %p85, %p86
      %s88 = ssub.s32 %s24, %s31
      %p89 = scmp.eq.s32.totalorder %s88, 0
      %s91 = sadd.s32 %s90, 1
      %s92 = scalar_select %p89, %s90, %s91
      %p95 = pneg %p89
      %p96 = scmp.eq.s32.totalorder %s16, 1
      %p97 = por %p95, %p96
      %p98 = scmp.ne.s32.totalorder %s90, %s93
      %p99 = scmp.eq.s32.totalorder %s16, 0
      %p100 = por %p98, %p99
      %p101 = scmp.ne.s32.totalorder %s90, %s93
      %p102 = scmp.eq.s32.totalorder %s21, 1
      %p103 = por %p101, %p102
      %p104 = scmp.ne.s32.totalorder %s93, %s94
      %p105 = scmp.eq.s32.totalorder %s21, 0
      %p106 = por %p104, %p105
      %p107 = scmp.ne.s32.totalorder %s93, %s94
      %p108 = scmp.eq.s32.totalorder %s22, 1
      %p109 = por %p107, %p108
      %p111 = scmp.ne.s32.totalorder %s94, %s110
      %p112 = scmp.eq.s32.totalorder %s22, 0
      %p113 = por %p111, %p112
      %s114 = ssub.s32 %s23, %s35
      %s115 = ssub.s32 %s24, %s31
      %s116 = sor.u32 %s114, %s115
      %p117 = scmp.eq.s32.totalorder %s116, 0
      %s119 = sadd.s32 %s118, 1
      %s120 = scalar_select %p117, %s118, %s119
      %p123 = pneg %p117
      %p124 = scmp.eq.s32.totalorder %s16, 1
      %p125 = por %p123, %p124
      %p126 = scmp.ne.s32.totalorder %s118, %s121
      %p127 = scmp.eq.s32.totalorder %s16, 0
      %p128 = por %p126, %p127
      %p129 = scmp.ne.s32.totalorder %s118, %s121
      %p130 = scmp.eq.s32.totalorder %s21, 1
      %p131 = por %p129, %p130
      %p132 = scmp.ne.s32.totalorder %s121, %s122
      %p133 = scmp.eq.s32.totalorder %s21, 0
      %p134 = por %p132, %p133
      %p135 = scmp.ne.s32.totalorder %s121, %s122
      %p136 = scmp.eq.s32.totalorder %s22, 1
      %p137 = por %p135, %p136
      %p139 = scmp.ne.s32.totalorder %s122, %s138
      %p140 = scmp.eq.s32.totalorder %s22, 0
      %p141 = por %p139, %p140
      %p142 = scmp.le.s32.totalorder 1, %s16
      %p143 = scmp.lt.s32.totalorder %s16, 3
      %p144 = pnand %p142, %p143
      %p145 = pneg %p144
      // Predicated region
      $region9: #{tpu_custom_call.1} parent=5 // pred_check
        _
      $region10: #{tpu_custom_call.1} parent=5 // pred_check_branch
        %147 = sbr.rel (%p144) target = $region12
      $region11: #{tpu_custom_call.1} parent=5 // pred_region
        %s148 = ssub.s32 %s16, 1
        // Predicated region
        $region13: #{tpu_custom_call.1} parent=11 // pred_check
          %p149 = pneg %p80
        $region14: #{tpu_custom_call.1} parent=11 // pred_check_branch
          %151 = sbr.rel (%p149) target = $region16
        $region15: #{tpu_custom_call.1} parent=11 // pred_region
          %s153 = ssub.s32 1024, 1024
          %154 = vsyncadd [#allocation7], %s153
          %s155 = smul.addr %s26, 64
          %s156 = scalar_lea.hbm %s1, %s155
          %s157 = sshll.u32 [#allocation6], 4
          %s158 = int_to_ptr.vmem [resolvable:$true] %s157
          %163 = dma.hbm_to_vmem [thread:$0]  %s156, 1024, %s158, [#allocation7], 64, 64, 4
        $region16: #{tpu_custom_call.1} parent=11 // pred_fallthru
          _
        // Predicated region
        $region17: #{tpu_custom_call.1} parent=11 // pred_check
          %p164 = pneg %p106
        $region18: #{tpu_custom_call.1} parent=11 // pred_check_branch
          %166 = sbr.rel (%p164) target = $region20
        $region19: #{tpu_custom_call.1} parent=11 // pred_region
          %p167 = scmp.lt.s32.totalorder %s26, 0
          %s168 = scalar_select %p167, %s26, 0
          %s169 = scalar_lea.vmem %s2, %s168
        $region20: #{tpu_custom_call.1} parent=11 // pred_fallthru
          _
      $region12: #{tpu_custom_call.1} parent=5 // pred_fallthru
        _
      %p170 = scmp.lt.s32.totalorder %s16, 2
      // Predicated region
      $region21: #{tpu_custom_call.1} parent=5 // pred_check
        %p171 = pneg %p170
      $region22: #{tpu_custom_call.1} parent=5 // pred_check_branch
        %173 = sbr.rel (%p171) target = $region24
      $region23: #{tpu_custom_call.1} parent=5 // pred_region
        // Predicated region
        $region25: #{tpu_custom_call.1} parent=23 // pred_check
          %p174 = pneg %p48
        $region26: #{tpu_custom_call.1} parent=23 // pred_check_branch
          %176 = sbr.rel (%p174) target = $region28
        $region27: #{tpu_custom_call.1} parent=23 // pred_region
          %s177 = sand.u32 %s38, 1
          %s178 = scalar_lea.sflag [#allocation4], %s177
          %s179 = sand.u32 %s38, 1
          %s180 = smul.addr %s179, 8
          %s181 = scalar_lea.vmem [#allocation3], %s180
          %s183 = ssub.s32 128, 128
          %184 = vsyncadd %s178, %s183
          %s185 = smul.addr %s23, 128
          %s186 = scalar_lea.hbm %s0, %s185
          %s188 = sshll.u32 %s181, 4
          %s189 = int_to_ptr.vmem [resolvable:$true] %s188
          %191 = dma.hbm_to_vmem [thread:$0]  %s186, 128, %s189, %s178
        $region28: #{tpu_custom_call.1} parent=23 // pred_fallthru
          _
      $region24: #{tpu_custom_call.1} parent=5 // pred_fallthru
        _
      %p192 = scmp.le.s32.totalorder 1, %s16
      %p193 = scmp.lt.s32.totalorder %s16, 3
      %p194 = pnand %p192, %p193
      %p195 = pneg %p194
      // Predicated region
      $region29: #{tpu_custom_call.1} parent=5 // pred_check
        _
      $region30: #{tpu_custom_call.1} parent=5 // pred_check_branch
        %197 = sbr.rel (%p194) target = $region32
      $region31: #{tpu_custom_call.1} parent=5 // pred_region
        %s198 = ssub.s32 %s16, 1
        %s199 = sand.u32 %s41, 1
        %s200 = scalar_lea.sflag [#allocation4], %s199
        %s201 = sand.u32 %s41, 1
        %s202 = smul.addr %s201, 8
        %s203 = scalar_lea.vmem [#allocation3], %s202
        // Predicated region
        $region33: #{tpu_custom_call.1} parent=31 // pred_check
          %p204 = pneg %p54
        $region34: #{tpu_custom_call.1} parent=31 // pred_check_branch
          %206 = sbr.rel (%p204) target = $region36
        $region35: #{tpu_custom_call.1} parent=31 // pred_region
          %207 = dma.done %s200, 128
        $region36: #{tpu_custom_call.1} parent=31 // pred_fallthru
          _
        // Predicated region
        $region37: #{tpu_custom_call.1} parent=31 // pred_check
          %p208 = pneg %p80
        $region38: #{tpu_custom_call.1} parent=31 // pred_check_branch
          %210 = sbr.rel (%p208) target = $region40
        $region39: #{tpu_custom_call.1} parent=31 // pred_region
          %211 = dma.done [#allocation7], 1024
        $region40: #{tpu_custom_call.1} parent=31 // pred_fallthru
          _
        %s212 = sand.u32 %s41, 1
        %s213 = scalar_lea.sflag [#allocation4], %s212
        %s214 = sand.u32 %s41, 1
        %s215 = smul.addr %s214, 8
        %s216 = scalar_lea.vmem [#allocation3], %s215
        %p217 = pneg %p54
        %p218 = pneg %p51
        %p219 = pneg %p80
        %p220 = pneg %p77
        %p221 = scmp.lt.s32.totalorder %s26, 0
        %s222 = scalar_select %p221, %s26, 0
        %s223 = scalar_lea.vmem %s2, %s222
        %p224 = pneg %p106
        %p225 = pneg %p103
        %p226 = pneg %p134
        %p227 = pneg %p131
        %s228 = sand.u32 %s121, 1
        %s229 = scalar_lea.sflag [#allocation5], %s228
        %s230 = sand.u32 %s121, 1
        %s231 = smul.addr %s230, 8
        %s232 = scalar_lea.vmem [#allocation8], %s231
        %p233 = scmp.lt.s32.totalorder %s26, 0
        %s234 = scalar_select %p233, %s26, 0
        %s235 = scalar_lea.vmem %s2, %s234
        %p237 = scmp.eq.s32.totalorder %s26, 0
        // Predicated region
        $region41: #{tpu_custom_call.1} parent=31 // pred_check
          %p238 = pneg %p237
        $region42: #{tpu_custom_call.1} parent=31 // pred_check_branch
          %240 = sbr.rel (%p238) target = $region44
        $region43: #{tpu_custom_call.1} parent=31 // pred_region
          %v241 = vld [vmem:[%s203] sm:$0xff]
          %242 = vadd.xlane.f32.xlu0 %v241
          %v243 = vpop.xlane.xlu0 %242
          %v244 = vrcp.pop 128.0
          %v245 = vmul.f32 %v243, %v244
          %v246 = vsub.f32 %v241, %v245
          %v247 = vmul.f32 %v246, %v246
          %248 = vadd.xlane.f32.xlu0 %v247
          %v249 = vpop.xlane.xlu0 %248
          %v250 = vmul.f32 %v249, 0.007874016
          %v251 = vrsqrt.pop %v250
          %v252 = vmul.f32 %v250, %v251
          %vm253 = vcmp.eq.f32.partialorder %v250, inf
          %v254 = vsel %vm253, %v250, %v252
          %vm255 = vcmp.eq.f32.partialorder %v250, 0.0
          %v256 = vand.u32 %v250, 2147483648
          %v257 = vsel %vm255, %v256, %v254
          %v258 = vadd.f32 %v257, 1e-06
          %v259 = vrcp.pop %v258
          %v260 = vmul.f32 %v246, %v259
          %261 = vst [vmem:[#allocation2] sm:$0xff] %v260
        $region44: #{tpu_custom_call.1} parent=31 // pred_fallthru
          _
        %v262 = vld [vmem:[#allocation2] sm:$0xff]
        %v263 = vpack.c.bf16 %v262, %v262
        %v264 = vld [vmem:[#allocation6] sm:$0xf]
        %v265 = vld [vmem:[#allocation6 + $0x4] sm:$0xf]
        %v266 = vld [vmem:[#allocation6 + $0x8] sm:$0xf]
        %v267 = vld [vmem:[#allocation6 + $0xc] sm:$0xf]
        %v268 = vld [vmem:[#allocation6 + $0x10] sm:$0xf]
        %v269 = vld [vmem:[#allocation6 + $0x14] sm:$0xf]
        %v270 = vld [vmem:[#allocation6 + $0x18] sm:$0xf]
        %v271 = vld [vmem:[#allocation6 + $0x1c] sm:$0xf]
        %v272 = vld [vmem:[#allocation6 + $0x20] sm:$0xf]
        %v273 = vld [vmem:[#allocation6 + $0x24] sm:$0xf]
        %v274 = vld [vmem:[#allocation6 + $0x28] sm:$0xf]
        %v275 = vld [vmem:[#allocation6 + $0x2c] sm:$0xf]
        %v276 = vld [vmem:[#allocation6 + $0x30] sm:$0xf]
        %v277 = vld [vmem:[#allocation6 + $0x34] sm:$0xf]
        %v278 = vld [vmem:[#allocation6 + $0x38] sm:$0xf]
        %v279 = vld [vmem:[#allocation6 + $0x3c] sm:$0xf]
        %v280 = vld [vmem:[%s235] sm:$0x1]
        %v282 = vlaneseq
        %v283 = vshrl.u32 %v282, 7
        %v284 = vsub.s32 0, %v283
        %v285 = vrot.slane %v280, %v284
        %v303 = vunpack.c.l.b16 %v264
        %v304 = vunpack.c.l.b16 %v265
        %v305 = vunpack.c.l.b16 %v266
        %v306 = vunpack.c.l.b16 %v267
        %v307 = vunpack.c.l.b16 %v268
        %v308 = vunpack.c.l.b16 %v269
        %v309 = vunpack.c.l.b16 %v270
        %v310 = vunpack.c.l.b16 %v271
        %v311 = vunpack.c.l.b16 %v272
        %v312 = vunpack.c.l.b16 %v273
        %v313 = vunpack.c.l.b16 %v274
        %v314 = vunpack.c.l.b16 %v275
        %v315 = vunpack.c.l.b16 %v276
        %v316 = vunpack.c.l.b16 %v277
        %v317 = vunpack.c.l.b16 %v278
        %v318 = vunpack.c.l.b16 %v279
        %v319 = vpack.c.b16 %v304, %v303
        %v320 = vpack.c.b16 %v306, %v305
        %v321 = vpack.c.b16 %v308, %v307
        %v322 = vpack.c.b16 %v310, %v309
        %v323 = vpack.c.b16 %v312, %v311
        %v324 = vpack.c.b16 %v314, %v313
        %v325 = vpack.c.b16 %v316, %v315
        %v326 = vpack.c.b16 %v318, %v317
        %335 = vmatprep.subr.bf16.mxu0 0
        %336 = vmatpush1.bf16.msra.mxu0 %v319
        %337 = vmatprep.subr.bf16.mxu0 0
        %338 = vmatpush1.bf16.msra.mxu0 %v320
        %339 = vmatprep.subr.bf16.mxu0 0
        %340 = vmatpush1.bf16.msra.mxu0 %v321
        %341 = vmatprep.subr.bf16.mxu0 0
        %342 = vmatpush1.bf16.msra.mxu0 %v322
        %343 = vmatprep.subr.bf16.mxu0 0
        %344 = vmatpush1.bf16.msra.mxu0 %v323
        %345 = vmatprep.subr.bf16.mxu0 0
        %346 = vmatpush1.bf16.msra.mxu0 %v324
        %347 = vmatprep.subr.bf16.mxu0 0
        %348 = vmatpush1.bf16.msra.mxu0 %v325
        %349 = vmatprep.subr.bf16.mxu0 0
        %350 = vmatpush1.bf16.msra.mxu0 %v326
        %351 = vmatprep.subr.bf16.mxu0 0
        %352 = vmatpush1.bf16.msra.mxu0 0
        %353 = vmatprep.subr.bf16.mxu0 0
        %354 = vmatpush1.bf16.msra.mxu0 0
        %355 = vmatprep.subr.bf16.mxu0 0
        %356 = vmatpush1.bf16.msra.mxu0 0
        %357 = vmatprep.subr.bf16.mxu0 0
        %358 = vmatpush1.bf16.msra.mxu0 0
        %359 = vmatprep.subr.bf16.mxu0 0
        %360 = vmatpush1.bf16.msra.mxu0 0
        %361 = vmatprep.subr.bf16.mxu0 0
        %362 = vmatpush1.bf16.msra.mxu0 0
        %363 = vmatprep.subr.bf16.mxu0 0
        %364 = vmatpush1.bf16.msra.mxu0 0
        %365 = vmatprep.subr.bf16.mxu0 0
        %366 = vmatpush1.bf16.msra.mxu0 0
        %367 = vmatprep.mubr.bf16.mxu0 0
        %368 = vmatmul.mubr.bf16.gmra.mrb[0].mxu0 %v263
        %v369 = vpop.f32.mrb[0].mxu0
        %v370 = vadd.f32 %v285, %v369
        %v371 = vpop.f32.mrb[0].mxu0
        %v372 = vpop.f32.mrb[0].mxu0
        %v373 = vpop.f32.mrb[0].mxu0
        %374 = vdwg.mxu0
        %v375 = vld [vmem:[%s203] sm:$0xff]
        %v376 = vadd.f32 %v375, %v370
        %377 = vst [vmem:[%s232] sm:$0xff] %v376
        %s378 = sand.u32 %s121, 1
        %s379 = scalar_lea.sflag [#allocation5], %s378
        %s380 = sand.u32 %s121, 1
        %s381 = smul.addr %s380, 8
        %s382 = scalar_lea.vmem [#allocation8], %s381
        // Predicated region
        $region45: #{tpu_custom_call.1} parent=31 // pred_check
          %p383 = pneg %p131
        $region46: #{tpu_custom_call.1} parent=31 // pred_check_branch
          %385 = sbr.rel (%p383) target = $region48
        $region47: #{tpu_custom_call.1} parent=31 // pred_region
          %s387 = ssub.s32 128, 128
          %388 = vsyncadd %s379, %s387
          %s389 = sadd.s32 %s26, %s25
          %s390 = smul.addr %s389, 128
          %s391 = scalar_lea.hbm %s3, %s390
          %s393 = sshll.u32 %s382, 4
          %s394 = int_to_ptr.vmem [resolvable:$true] %s393
          %396 = dma.vmem_to_hbm [thread:$0]  %s394, 128, %s391, %s379
        $region48: #{tpu_custom_call.1} parent=31 // pred_fallthru
          _
      $region32: #{tpu_custom_call.1} parent=5 // pred_fallthru
        _
      %p397 = scmp.le.s32.totalorder 2, %s16
      // Predicated region
      $region49: #{tpu_custom_call.1} parent=5 // pred_check
        %p398 = pneg %p397
      $region50: #{tpu_custom_call.1} parent=5 // pred_check_branch
        %400 = sbr.rel (%p398) target = $region52
      $region51: #{tpu_custom_call.1} parent=5 // pred_region
        %s401 = ssub.s32 %s16, 2
        // Predicated region
        $region53: #{tpu_custom_call.1} parent=51 // pred_check
          %p402 = pneg %p137
        $region54: #{tpu_custom_call.1} parent=51 // pred_check_branch
          %404 = sbr.rel (%p402) target = $region56
        $region55: #{tpu_custom_call.1} parent=51 // pred_region
          %s405 = sand.u32 %s122, 1
          %s406 = scalar_lea.sflag [#allocation5], %s405
          %s407 = sand.u32 %s122, 1
          %s408 = smul.addr %s407, 8
          %s409 = scalar_lea.vmem [#allocation8], %s408
          %410 = dma.done %s406, 128
        $region56: #{tpu_custom_call.1} parent=51 // pred_fallthru
          _
      $region52: #{tpu_custom_call.1} parent=5 // pred_fallthru
        _
    $region6: #{tpu_custom_call.1} parent=1 // loop_footer
      %s20 = sadd.s32 1, %s16
    $region7: #{tpu_custom_call.1} parent=1 // loop_footer_branch
      %15 = sbr.rel target = $region3
    $region8: #{tpu_custom_call.1} parent=1 // loop_exit
      _
    %411 = vsyncpa [#allocation4], 1
    %s412 = scalar_lea.sflag [#allocation4], 1
    %413 = vsyncpa %s412, 1
    %414 = vsyncpa [#allocation7], 1
    %415 = vsyncpa [#allocation5], 1
    %s416 = scalar_lea.sflag [#allocation5], 1
    %417 = vsyncpa %s416, 1

</llo_original>
